<compile_context>
chip_gen: v7x
topology: tpu7x:2x2x1
jax: 0.10.0
libtpu: 0.0.40
codegen_flags: <defaults>
</compile_context>

<pallas_src>
import functools

import jax
import jax.numpy as jnp
from jax.experimental import pallas as pl
from jax.experimental.pallas import tpu as pltpu


def _pool_att_kernel(x_ref, w1_ref, w2_ref, att_ref, sum_sc, max_sc, *, inv_hw):
    # x_ref:  (1, C, tHW)   one batch element, one spatial tile
    # w1_ref: (Cr, C)       first 1x1-conv weight
    # w2_ref: (C, Cr)       second 1x1-conv weight
    # att_ref:(1, C, 1)     per-channel attention output (f32)
    # sum_sc/max_sc: (C, 1) f32 running accumulators (persist across tiles)
    t = pl.program_id(1)
    x = x_ref[0]                                                      # (C, tHW)
    part_sum = jnp.sum(x.astype(jnp.float32), axis=1, keepdims=True)  # (C, 1)
    part_max = jnp.max(x, axis=1, keepdims=True).astype(jnp.float32)  # (C, 1)

    @pl.when(t == 0)
    def _():
        sum_sc[...] = jnp.zeros_like(sum_sc)
        max_sc[...] = jnp.full_like(max_sc, -jnp.inf)

    sum_sc[...] = sum_sc[...] + part_sum
    max_sc[...] = jnp.maximum(max_sc[...], part_max)

    @pl.when(t == pl.num_programs(1) - 1)
    def _():
        w1 = w1_ref[...].astype(jnp.float32)                          # (Cr, C)
        w2 = w2_ref[...].astype(jnp.float32)                          # (C, Cr)

        def mlp(v):  # v: (C, 1)
            h = jnp.maximum(
                jnp.dot(w1, v, preferred_element_type=jnp.float32), 0.0)
            return jnp.dot(w2, h, preferred_element_type=jnp.float32)

        avg = sum_sc[...] * inv_hw                                    # (C, 1)
        att = jax.nn.sigmoid(mlp(avg) + mlp(max_sc[...]))             # (C, 1)
        att_ref[0] = att.astype(att_ref.dtype)


def _scale_kernel(x_ref, att_ref, o_ref):
    # x_ref: (1, C, tHW); att_ref: (1, C, 1); o_ref: (1, C, tHW)
    att = att_ref[0].astype(o_ref.dtype)                              # (C, 1)
    o_ref[0] = x_ref[0] * att                                         # native-dtype multiply/store


def _choose_hw_tile(hw, c, itemsize, max_block_bytes=1 << 21):
    """Largest multiple of 128 dividing hw with c*tile*itemsize <= budget."""
    if hw % 128 != 0:
        return hw  # full-extent block is exempt from the lane rule
    budget_lanes = max(128, (max_block_bytes // (c * itemsize)) // 128 * 128)
    best = 128
    t = 128
    while t <= hw:
        if hw % t == 0 and t <= budget_lanes:
            best = t
        t += 128
    return best


def channel_attention(x_nchw, w1, w2, hw_tile=None):
    """x_nchw: (B, C, H, W); w1: (Cr, C); w2: (C, Cr). Returns (B, C, H, W)."""
    B, C, H, W = x_nchw.shape
    Cr = w1.shape[0]
    HW = H * W
    itemsize = int(jnp.dtype(x_nchw.dtype).itemsize)

    # NCHW-native: a pure reshape (no data movement).
    x = x_nchw.reshape(B, C, HW)

    if hw_tile is None:
        hw_tile = _choose_hw_tile(HW, C, itemsize)
    assert HW % hw_tile == 0, "hw_tile must divide H*W"
    n_hw = HW // hw_tile

    # ---- Pass 1: pooled stats + MLP + sigmoid -> att (B, C, 1) ------------
    att = pl.pallas_call(
        functools.partial(_pool_att_kernel, inv_hw=1.0 / HW),
        out_shape=jax.ShapeDtypeStruct((B, C, 1), jnp.float32),
        grid_spec=pltpu.PrefetchScalarGridSpec(
            num_scalar_prefetch=0,
            grid=(B, n_hw),
            in_specs=[
                pl.BlockSpec((1, C, hw_tile), lambda b, t: (b, 0, t)),
                pl.BlockSpec((Cr, C), lambda b, t: (0, 0)),
                pl.BlockSpec((C, Cr), lambda b, t: (0, 0)),
            ],
            out_specs=pl.BlockSpec((1, C, 1), lambda b, t: (b, 0, 0)),
            scratch_shapes=[
                pltpu.VMEM((C, 1), jnp.float32),   # running sum
                pltpu.VMEM((C, 1), jnp.float32),   # running max
            ],
        ),
        compiler_params=pltpu.CompilerParams(
            dimension_semantics=("parallel", "arbitrary")),
        cost_estimate=pl.CostEstimate(
            flops=int(2 * B * C * HW + 4 * B * C * Cr),
            transcendentals=int(B * C),
            bytes_accessed=int(B * C * HW * itemsize + B * C * 4),
        ),
    )(x, w1, w2)

    # ---- Pass 2: stream x tiles and scale by att (fully parallel grid) ----
    out = pl.pallas_call(
        _scale_kernel,
        out_shape=jax.ShapeDtypeStruct((B, C, HW), x.dtype),
        grid_spec=pltpu.PrefetchScalarGridSpec(
            num_scalar_prefetch=0,
            grid=(B, n_hw),
            in_specs=[
                pl.BlockSpec((1, C, hw_tile), lambda b, t: (b, 0, t)),
                pl.BlockSpec((1, C, 1), lambda b, t: (b, 0, 0)),
            ],
            out_specs=pl.BlockSpec((1, C, hw_tile), lambda b, t: (b, 0, t)),
        ),
        compiler_params=pltpu.CompilerParams(
            dimension_semantics=("parallel", "parallel")),
        cost_estimate=pl.CostEstimate(
            flops=int(B * C * HW),
            transcendentals=0,
            bytes_accessed=int(2 * B * C * HW * itemsize),
        ),
    )(x, att)

    return out.reshape(B, C, H, W)


def _reference(x_nchw, w1, w2):
    # Pure-JAX reference of the PyTorch forward.
    avg = jnp.mean(x_nchw, axis=(2, 3))                       # (B, C)
    mx = jnp.max(x_nchw, axis=(2, 3))                         # (B, C)

    def mlp(v):  # v: (B, C)
        h = jnp.maximum(v @ w1.T, 0.0)                        # (B, Cr)
        return h @ w2.T                                       # (B, C)

    att = jax.nn.sigmoid(mlp(avg) + mlp(mx))                  # (B, C)
    return x_nchw * att[:, :, None, None]


if __name__ == "__main__":
    key = jax.random.PRNGKey(0)
    k_x, k_w1, k_w2 = jax.random.split(key, 3)

    B, C, H, W = 2, 64, 16, 16
    reduction_ratio = 16
    Cr = C // reduction_ratio

    x = jax.random.normal(k_x, (B, C, H, W), dtype=jnp.float32)
    # Deterministic synthetic 1x1-conv weights (no bias).
    w1 = jax.random.normal(k_w1, (Cr, C), dtype=jnp.float32) * 0.1
    w2 = jax.random.normal(k_w2, (C, Cr), dtype=jnp.float32) * 0.1

    # hw_tile=128 forces multiple spatial tiles (HW=256) so the streaming
    # reduction path is exercised even at this small test shape.
    out = jax.block_until_ready(channel_attention(x, w1, w2, hw_tile=128))
    ref = jax.block_until_ready(_reference(x, w1, w2))

    assert out.shape == (B, C, H, W)
    assert jnp.allclose(out, ref, atol=1e-5, rtol=1e-5), "mismatch vs reference"
    print("KERNEL_OK")
</pallas_src>

<mosaic_0001>
module attributes {stable_mosaic.version = 11 : i64} {
  func.func @_pool_att_kernel(%arg0: i32, %arg1: i32, %arg2: memref<1x64x128xf32, #tpu.memory_space<vmem>>, %arg3: memref<4x64xf32, #tpu.memory_space<vmem>>, %arg4: memref<64x4xf32, #tpu.memory_space<vmem>>, %arg5: memref<1x64x1xf32, #tpu.memory_space<vmem>>, %arg6: memref<64x1xf32, #tpu.memory_space<vmem>>, %arg7: memref<64x1xf32, #tpu.memory_space<vmem>>) attributes {dimension_semantics = [#tpu.dimension_semantics<parallel>, #tpu.dimension_semantics<arbitrary>], iteration_bounds = array<i64: 2, 2>, scalar_prefetch = 0 : i64, scratch_operands = 2 : i64, tpu.core_type = #tpu.core_type<tc>, window_params = [{transform_indices = @transform_0, window_bounds = array<i64: 1, 64, 128>}, {pipeline_mode = #tpu.pipeline_mode<synchronous>, transform_indices = @transform_1, window_bounds = array<i64: 4, 64>}, {pipeline_mode = #tpu.pipeline_mode<synchronous>, transform_indices = @transform_2, window_bounds = array<i64: 64, 4>}, {transform_indices = @transform_3, window_bounds = array<i64: 1, 64, 1>}]} {
    %c0 = arith.constant 0 : index
    %c0_0 = arith.constant 0 : index
    %c0_1 = arith.constant 0 : index
    %0 = vector.load %arg2[%c0, %c0_0, %c0_1] : memref<1x64x128xf32, #tpu.memory_space<vmem>>, vector<1x64x128xf32>
    %1 = vector.shape_cast %0 : vector<1x64x128xf32> to vector<64x128xf32>
    %cst = arith.constant dense<0.000000e+00> : vector<64xf32>
    %2 = vector.multi_reduction <add>, %1, %cst [1] : vector<64x128xf32> to vector<64xf32>
    %3 = vector.shape_cast %2 : vector<64xf32> to vector<64x1xf32>
    %cst_2 = arith.constant dense<0xFF800000> : vector<64xf32>
    %4 = vector.multi_reduction <maximumf>, %1, %cst_2 [1] : vector<64x128xf32> to vector<64xf32>
    %5 = vector.shape_cast %4 : vector<64xf32> to vector<64x1xf32>
    %c0_i32 = arith.constant 0 : i32
    %6 = arith.cmpi eq, %arg1, %c0_i32 : i32
    %7 = arith.extui %6 : i1 to i32
    %c0_i32_3 = arith.constant 0 : i32
    %8 = arith.cmpi ne, %7, %c0_i32_3 : i32
    scf.if %8 {
      %cst_13 = arith.constant 0.000000e+00 : f32
      %18 = vector.broadcast %cst_13 : f32 to vector<64x1xf32>
      %c0_14 = arith.constant 0 : index
      %c0_15 = arith.constant 0 : index
      %19 = vector.load %arg6[%c0_14, %c0_15] : memref<64x1xf32, #tpu.memory_space<vmem>>, vector<64x1xf32>
      tpu.vector_store %arg6[%c0_14, %c0_15], %18 {strides = array<i32>} : memref<64x1xf32, #tpu.memory_space<vmem>>, vector<64x1xf32>,
      %cst_16 = arith.constant 0xFF800000 : f32
      %20 = vector.broadcast %cst_16 : f32 to vector<64x1xf32>
      %c0_17 = arith.constant 0 : index
      %c0_18 = arith.constant 0 : index
      %21 = vector.load %arg7[%c0_17, %c0_18] : memref<64x1xf32, #tpu.memory_space<vmem>>, vector<64x1xf32>
      tpu.vector_store %arg7[%c0_17, %c0_18], %20 {strides = array<i32>} : memref<64x1xf32, #tpu.memory_space<vmem>>, vector<64x1xf32>,
    } else {
    }
    %c0_4 = arith.constant 0 : index
    %c0_5 = arith.constant 0 : index
    %9 = vector.load %arg6[%c0_4, %c0_5] : memref<64x1xf32, #tpu.memory_space<vmem>>, vector<64x1xf32>
    %10 = arith.addf %9, %3 : vector<64x1xf32>
    %c0_6 = arith.constant 0 : index
    %c0_7 = arith.constant 0 : index
    %11 = vector.load %arg6[%c0_6, %c0_7] : memref<64x1xf32, #tpu.memory_space<vmem>>, vector<64x1xf32>
    tpu.vector_store %arg6[%c0_6, %c0_7], %10 {strides = array<i32>} : memref<64x1xf32, #tpu.memory_space<vmem>>, vector<64x1xf32>,
    %c0_8 = arith.constant 0 : index
    %c0_9 = arith.constant 0 : index
    %12 = vector.load %arg7[%c0_8, %c0_9] : memref<64x1xf32, #tpu.memory_space<vmem>>, vector<64x1xf32>
    %13 = arith.maximumf %12, %5 : vector<64x1xf32>
    %c0_10 = arith.constant 0 : index
    %c0_11 = arith.constant 0 : index
    %14 = vector.load %arg7[%c0_10, %c0_11] : memref<64x1xf32, #tpu.memory_space<vmem>>, vector<64x1xf32>
    tpu.vector_store %arg7[%c0_10, %c0_11], %13 {strides = array<i32>} : memref<64x1xf32, #tpu.memory_space<vmem>>, vector<64x1xf32>,
    %c1_i32 = arith.constant 1 : i32
    %15 = arith.cmpi eq, %arg1, %c1_i32 : i32
    %16 = arith.extui %15 : i1 to i32
    %c0_i32_12 = arith.constant 0 : i32
    %17 = arith.cmpi ne, %16, %c0_i32_12 : i32
    scf.if %17 {
      %c0_13 = arith.constant 0 : index
      %c0_14 = arith.constant 0 : index
      %18 = vector.load %arg3[%c0_13, %c0_14] : memref<4x64xf32, #tpu.memory_space<vmem>>, vector<4x64xf32>
      %c0_15 = arith.constant 0 : index
      %c0_16 = arith.constant 0 : index
      %19 = vector.load %arg4[%c0_15, %c0_16] : memref<64x4xf32, #tpu.memory_space<vmem>>, vector<64x4xf32>
      %c0_17 = arith.constant 0 : index
      %c0_18 = arith.constant 0 : index
      %20 = vector.load %arg6[%c0_17, %c0_18] : memref<64x1xf32, #tpu.memory_space<vmem>>, vector<64x1xf32>
      %cst_19 = arith.constant 3.906250e-03 : f32
      %21 = vector.broadcast %cst_19 : f32 to vector<64x1xf32>
      %22 = arith.mulf %20, %21 : vector<64x1xf32>
      %cst_20 = arith.constant dense<0.000000e+00> : vector<4x1xf32>
      %23 = tpu.matmul %18, %22, %cst_20 {dimension_numbers = #tpu.dot_dimension_numbers<[1], [0], [0], [1], [0, 0, 1, 1], [], []>} : vector<4x64xf32>, vector<64x1xf32>, vector<4x1xf32> -> vector<4x1xf32>
      %cst_21 = arith.constant 0.000000e+00 : f32
      %24 = vector.broadcast %cst_21 : f32 to vector<4x1xf32>
      %25 = arith.maximumf %23, %24 : vector<4x1xf32>
      %cst_22 = arith.constant dense<0.000000e+00> : vector<64x1xf32>
      %26 = tpu.matmul %19, %25, %cst_22 {dimension_numbers = #tpu.dot_dimension_numbers<[1], [0], [0], [1], [0, 0, 1, 1], [], []>} : vector<64x4xf32>, vector<4x1xf32>, vector<64x1xf32> -> vector<64x1xf32>
      %c0_23 = arith.constant 0 : index
      %c0_24 = arith.constant 0 : index
      %27 = vector.load %arg7[%c0_23, %c0_24] : memref<64x1xf32, #tpu.memory_space<vmem>>, vector<64x1xf32>
      %cst_25 = arith.constant dense<0.000000e+00> : vector<4x1xf32>
      %28 = tpu.matmul %18, %27, %cst_25 {dimension_numbers = #tpu.dot_dimension_numbers<[1], [0], [0], [1], [0, 0, 1, 1], [], []>} : vector<4x64xf32>, vector<64x1xf32>, vector<4x1xf32> -> vector<4x1xf32>
      %cst_26 = arith.constant 0.000000e+00 : f32
      %29 = vector.broadcast %cst_26 : f32 to vector<4x1xf32>
      %30 = arith.maximumf %28, %29 : vector<4x1xf32>
      %cst_27 = arith.constant dense<0.000000e+00> : vector<64x1xf32>
      %31 = tpu.matmul %19, %30, %cst_27 {dimension_numbers = #tpu.dot_dimension_numbers<[1], [0], [0], [1], [0, 0, 1, 1], [], []>} : vector<64x4xf32>, vector<4x1xf32>, vector<64x1xf32> -> vector<64x1xf32>
      %32 = arith.addf %26, %31 : vector<64x1xf32>
      %33 = arith.negf %32 : vector<64x1xf32>
      %34 = math.exp %33 : vector<64x1xf32>
      %cst_28 = arith.constant 1.000000e+00 : f32
      %35 = vector.broadcast %cst_28 : f32 to vector<64x1xf32>
      %36 = arith.addf %35, %34 : vector<64x1xf32>
      %37 = arith.divf %35, %36 : vector<64x1xf32>
      %c0_29 = arith.constant 0 : index
      %c0_30 = arith.constant 0 : index
      %c0_31 = arith.constant 0 : index
      %38 = vector.load %arg5[%c0_29, %c0_30, %c0_31] : memref<1x64x1xf32, #tpu.memory_space<vmem>>, vector<1x64x1xf32>
      %39 = vector.shape_cast %38 : vector<1x64x1xf32> to vector<64x1xf32>
      %40 = vector.shape_cast %37 : vector<64x1xf32> to vector<1x64x1xf32>
      tpu.vector_store %arg5[%c0_29, %c0_30, %c0_31], %40 {strides = array<i32>} : memref<1x64x1xf32, #tpu.memory_space<vmem>>, vector<1x64x1xf32>,
    } else {
    }
    return
  }
  func.func @transform_0(%arg0: i32, %arg1: i32) -> (i32, i32, i32) {
    %c0_i32 = arith.constant 0 : i32
    %c0_i32_0 = arith.constant 0 : i32
    return %arg0, %c0_i32, %arg1 : i32, i32, i32
  }
  func.func @transform_1(%arg0: i32, %arg1: i32) -> (i32, i32) {
    %c0_i32 = arith.constant 0 : i32
    %c0_i32_0 = arith.constant 0 : i32
    %c0_i32_1 = arith.constant 0 : i32
    return %c0_i32, %c0_i32_0 : i32, i32
  }
  func.func @transform_2(%arg0: i32, %arg1: i32) -> (i32, i32) {
    %c0_i32 = arith.constant 0 : i32
    %c0_i32_0 = arith.constant 0 : i32
    %c0_i32_1 = arith.constant 0 : i32
    return %c0_i32, %c0_i32_0 : i32, i32
  }
  func.func @transform_3(%arg0: i32, %arg1: i32) -> (i32, i32, i32) {
    %c0_i32 = arith.constant 0 : i32
    %c0_i32_0 = arith.constant 0 : i32
    %c0_i32_1 = arith.constant 0 : i32
    return %arg0, %c0_i32, %c0_i32_0 : i32, i32, i32
  }
}

</mosaic_0001>

<llo_original>
// kernel: tpu_custom_call.1
$region0: #{tpu_custom_call.1}
  #allocation0 [shape = 'u32[]', space=smem, size = 0x4, offset = 0x4, fixed_abs, tag = 'smem constant byte address 0x4 - core index']
  #allocation1 [shape = 'u32[144,128]{1,0:T(1,128)}', space=vmem, size = 0x12000, scoped, tag = 'internal scratch']
  #allocation2 [shape = 'f32[64,1]{1,0:T(8,128)}', space=vmem, size = 0x8000, scoped, tag = 'scratch operand']
  #allocation3 [shape = 'f32[64,1]{1,0:T(8,128)}', space=vmem, size = 0x8000, scoped, tag = 'scratch operand']
  %s0 = inlined_call_operand.hbm [shape: f32[2,64,256], index: 0, kind: input, shape index: {}]
  %s1 = inlined_call_operand.vmem [shape: f32[4,64], index: 1, kind: input, shape index: {}]
  %s2 = inlined_call_operand.vmem [shape: f32[64,4], index: 2, kind: input, shape index: {}]
  %s3 = inlined_call_operand.vmem [shape: f32[2,64,1], index: 3, kind: output, shape index: {}]
  %s4 = sld [smem:[#allocation0]]
  $region57: #{tpu_custom_call.1} parent=0
    _
  %s6 = ssub.s32 1, %s4
  %s7 = scalar_select 0, %s6, %s4
  $region1: #{tpu_custom_call.1} parent=0
    #allocation4 [shape = 'u8[65536]{0}', space=vmem, size = 0x10000, scoped, tag = 'input window, operand 0']
    #allocation5 [shape = 's32[2]{0}', space=sflag, size = 0x8, scoped, tag = 'scoped memory for tpu_custom_call.1']
    %8 = vsyncpa [#allocation5], 0
    %s9 = scalar_lea.sflag [#allocation5], 1
    %10 = vsyncpa %s9, 0
    loop: start=0, step=1, limit=6
    $region2: #{tpu_custom_call.1} parent=1 // loop_pre_header
      _
    $region3: #{tpu_custom_call.1} parent=1 // loop_header
      %s12 = sphi 0, %s16
      %p13 = scmp.ge.s32.totalorder %s12, 6
      %s19 = sphi 0, %s31
      %s20 = sphi 0, %s27
      %s21 = sphi 0, %s19
      %s22 = sphi 0, %s20
      %s23 = sphi 0, %s21
      %s24 = sphi 0, %s22
      %s36 = sphi 0, %s38
      %s39 = sphi 0, %s36
      %s40 = sphi 0, %s39
      %s56 = sphi 0, %s40
      %s60 = sphi 0, %s60
      %s62 = sphi 0, %s60
      %s63 = sphi 0, %s62
      %s77 = sphi 0, %s63
      %s81 = sphi 0, %s81
      %s83 = sphi 0, %s81
      %s84 = sphi 0, %s83
      %s98 = sphi 0, %s84
      %s104 = sphi 0, %s106
      %s107 = sphi 0, %s104
      %s108 = sphi 0, %s107
      %s124 = sphi 0, %s108
    $region4: #{tpu_custom_call.1} parent=1 // loop_header_branch
      %15 = sbr.rel (%p13) target = $region8
    $region5: #{tpu_custom_call.1} parent=1 // loop_body
      %s17 = ssub.s32 %s12, 1
      %s18 = ssub.s32 %s12, 2
      %s25 = sadd.s32 1, %s20
      %p26 = scmp.ge.s32.totalorder %s25, 2
      %s27 = scalar_select %p26, 0, %s25
      %s28 = sadd.s32 1, %s19
      %s29 = scalar_select %p26, %s28, %s19
      %p30 = scmp.ge.s32.totalorder %s29, 2
      %s31 = scalar_select %p30, 0, %s29
      %s32 = ssub.s32 %s19, %s31
      %s33 = ssub.s32 %s20, %s27
      %s34 = sor.u32 %s32, %s33
      %p35 = scmp.eq.s32.totalorder %s34, 0
      %s37 = sadd.s32 %s36, 1
      %s38 = scalar_select %p35, %s36, %s37
      %p41 = pneg %p35
      %p42 = scmp.eq.s32.totalorder %s12, 3
      %p43 = por %p41, %p42
      %p44 = scmp.ne.s32.totalorder %s36, %s39
      %p45 = scmp.eq.s32.totalorder %s12, 0
      %p46 = por %p44, %p45
      %p47 = scmp.ne.s32.totalorder %s36, %s39
      %p48 = scmp.eq.s32.totalorder %s17, 3
      %p49 = por %p47, %p48
      %p50 = scmp.ne.s32.totalorder %s39, %s40
      %p51 = scmp.eq.s32.totalorder %s17, 0
      %p52 = por %p50, %p51
      %p53 = scmp.ne.s32.totalorder %s39, %s40
      %p54 = scmp.eq.s32.totalorder %s18, 3
      %p55 = por %p53, %p54
      %p57 = scmp.ne.s32.totalorder %s40, %s56
      %p58 = scmp.eq.s32.totalorder %s18, 0
      %p59 = por %p57, %p58
      %s61 = sadd.s32 %s60, 1
      %p64 = scmp.eq.s32.totalorder %s12, 3
      %p65 = scmp.ne.s32.totalorder %s60, %s62
      %p66 = scmp.eq.s32.totalorder %s12, 0
      %p67 = por %p65, %p66
      %p68 = scmp.ne.s32.totalorder %s60, %s62
      %p69 = scmp.eq.s32.totalorder %s17, 3
      %p70 = por %p68, %p69
      %p71 = scmp.ne.s32.totalorder %s62, %s63
      %p72 = scmp.eq.s32.totalorder %s17, 0
      %p73 = por %p71, %p72
      %p74 = scmp.ne.s32.totalorder %s62, %s63
      %p75 = scmp.eq.s32.totalorder %s18, 3
      %p76 = por %p74, %p75
      %p78 = scmp.ne.s32.totalorder %s63, %s77
      %p79 = scmp.eq.s32.totalorder %s18, 0
      %p80 = por %p78, %p79
      %s82 = sadd.s32 %s81, 1
      %p85 = scmp.eq.s32.totalorder %s12, 3
      %p86 = scmp.ne.s32.totalorder %s81, %s83
      %p87 = scmp.eq.s32.totalorder %s12, 0
      %p88 = por %p86, %p87
      %p89 = scmp.ne.s32.totalorder %s81, %s83
      %p90 = scmp.eq.s32.totalorder %s17, 3
      %p91 = por %p89, %p90
      %p92 = scmp.ne.s32.totalorder %s83, %s84
      %p93 = scmp.eq.s32.totalorder %s17, 0
      %p94 = por %p92, %p93
      %p95 = scmp.ne.s32.totalorder %s83, %s84
      %p96 = scmp.eq.s32.totalorder %s18, 3
      %p97 = por %p95, %p96
      %p99 = scmp.ne.s32.totalorder %s84, %s98
      %p100 = scmp.eq.s32.totalorder %s18, 0
      %p101 = por %p99, %p100
      %s102 = ssub.s32 %s19, %s31
      %p103 = scmp.eq.s32.totalorder %s102, 0
      %s105 = sadd.s32 %s104, 1
      %s106 = scalar_select %p103, %s104, %s105
      %p109 = pneg %p103
      %p110 = scmp.eq.s32.totalorder %s12, 3
      %p111 = por %p109, %p110
      %p112 = scmp.ne.s32.totalorder %s104, %s107
      %p113 = scmp.eq.s32.totalorder %s12, 0
      %p114 = por %p112, %p113
      %p115 = scmp.ne.s32.totalorder %s104, %s107
      %p116 = scmp.eq.s32.totalorder %s17, 3
      %p117 = por %p115, %p116
      %p118 = scmp.ne.s32.totalorder %s107, %s108
      %p119 = scmp.eq.s32.totalorder %s17, 0
      %p120 = por %p118, %p119
      %p121 = scmp.ne.s32.totalorder %s107, %s108
      %p122 = scmp.eq.s32.totalorder %s18, 3
      %p123 = por %p121, %p122
      %p125 = scmp.ne.s32.totalorder %s108, %s124
      %p126 = scmp.eq.s32.totalorder %s18, 0
      %p127 = por %p125, %p126
      %p128 = scmp.le.s32.totalorder 1, %s12
      %p129 = scmp.lt.s32.totalorder %s12, 5
      %p130 = pnand %p128, %p129
      %p131 = pneg %p130
      // Predicated region
      $region9: #{tpu_custom_call.1} parent=5 // pred_check
        _
      $region10: #{tpu_custom_call.1} parent=5 // pred_check_branch
        %133 = sbr.rel (%p130) target = $region12
      $region11: #{tpu_custom_call.1} parent=5 // pred_region
        %s134 = ssub.s32 %s12, 1
        // Predicated region
        $region13: #{tpu_custom_call.1} parent=11 // pred_check
          %p135 = pneg %p73
        $region14: #{tpu_custom_call.1} parent=11 // pred_check_branch
          %137 = sbr.rel (%p135) target = $region16
        $region15: #{tpu_custom_call.1} parent=11 // pred_region
          _
        $region16: #{tpu_custom_call.1} parent=11 // pred_fallthru
          _
        // Predicated region
        $region17: #{tpu_custom_call.1} parent=11 // pred_check
          %p138 = pneg %p94
        $region18: #{tpu_custom_call.1} parent=11 // pred_check_branch
          %140 = sbr.rel (%p138) target = $region20
        $region19: #{tpu_custom_call.1} parent=11 // pred_region
          _
        $region20: #{tpu_custom_call.1} parent=11 // pred_fallthru
          _
      $region12: #{tpu_custom_call.1} parent=5 // pred_fallthru
        _
      %p141 = scmp.lt.s32.totalorder %s12, 4
      // Predicated region
      $region21: #{tpu_custom_call.1} parent=5 // pred_check
        %p142 = pneg %p141
      $region22: #{tpu_custom_call.1} parent=5 // pred_check_branch
        %144 = sbr.rel (%p142) target = $region24
      $region23: #{tpu_custom_call.1} parent=5 // pred_region
        // Predicated region
        $region25: #{tpu_custom_call.1} parent=23 // pred_check
          %p145 = pneg %p46
        $region26: #{tpu_custom_call.1} parent=23 // pred_check_branch
          %147 = sbr.rel (%p145) target = $region28
        $region27: #{tpu_custom_call.1} parent=23 // pred_region
          %s148 = sand.u32 %s36, 1
          %s149 = scalar_lea.sflag [#allocation5], %s148
          %s150 = sand.u32 %s36, 1
          %s151 = smul.addr %s150, 64
          %s152 = scalar_lea.vmem [#allocation4], %s151
          %s154 = ssub.s32 1024, 1024
          %155 = vsyncadd %s149, %s154
          %s156 = smul.addr %s19, 16
          %s157 = sadd.s32 %s20, %s156
          %s158 = smul.addr %s157, 128
          %s159 = scalar_lea.hbm %s0, %s158
          %s160 = sshll.u32 %s152, 4
          %s161 = int_to_ptr.vmem [resolvable:$true] %s160
          %166 = dma.hbm_to_vmem [thread:$0]  %s159, 1024, %s161, %s149, 256, 128, 8
        $region28: #{tpu_custom_call.1} parent=23 // pred_fallthru
          _
      $region24: #{tpu_custom_call.1} parent=5 // pred_fallthru
        _
      %p167 = scmp.le.s32.totalorder 1, %s12
      %p168 = scmp.lt.s32.totalorder %s12, 5
      %p169 = pnand %p167, %p168
      %p170 = pneg %p169
      // Predicated region
      $region29: #{tpu_custom_call.1} parent=5 // pred_check
        _
      $region30: #{tpu_custom_call.1} parent=5 // pred_check_branch
        %172 = sbr.rel (%p169) target = $region32
      $region31: #{tpu_custom_call.1} parent=5 // pred_region
        %s173 = ssub.s32 %s12, 1
        %s174 = sand.u32 %s39, 1
        %s175 = scalar_lea.sflag [#allocation5], %s174
        %s176 = sand.u32 %s39, 1
        %s177 = smul.addr %s176, 64
        %s178 = scalar_lea.vmem [#allocation4], %s177
        // Predicated region
        $region33: #{tpu_custom_call.1} parent=31 // pred_check
          %p179 = pneg %p52
        $region34: #{tpu_custom_call.1} parent=31 // pred_check_branch
          %181 = sbr.rel (%p179) target = $region36
        $region35: #{tpu_custom_call.1} parent=31 // pred_region
          %182 = dma.done %s175, 1024
        $region36: #{tpu_custom_call.1} parent=31 // pred_fallthru
          _
        %s183 = sand.u32 %s39, 1
        %s184 = scalar_lea.sflag [#allocation5], %s183
        %s185 = sand.u32 %s39, 1
        %s186 = smul.addr %s185, 64
        %s187 = scalar_lea.vmem [#allocation4], %s186
        %p188 = pneg %p52
        %p189 = pneg %p49
        %p190 = pneg %p73
        %p191 = pneg %p70
        %p192 = pneg %p94
        %p193 = pneg %p91
        %p194 = pneg %p120
        %p195 = pneg %p117
        %p196 = scmp.lt.s32.totalorder %s21, 1
        %s197 = scalar_select %p196, %s21, 1
        %s198 = smul.addr %s197, 8
        %s199 = smul.addr %s198, 8
        %s200 = scalar_lea.vmem %s3, %s199
        %p201 = scmp.lt.s32.totalorder %s21, 1
        %s202 = scalar_select %p201, %s21, 1
        %s203 = smul.addr %s202, 8
        %s204 = smul.addr %s203, 8
        %s205 = scalar_lea.vmem %s3, %s204
        %v206 = vld [vmem:[%s178] sm:$0xff]
        %v207 = vld [vmem:[%s178 + $0x8] sm:$0xff]
        %v208 = vld [vmem:[%s178 + $0x10] sm:$0xff]
        %v209 = vld [vmem:[%s178 + $0x18] sm:$0xff]
        %v210 = vld [vmem:[%s178 + $0x20] sm:$0xff]
        %v211 = vld [vmem:[%s178 + $0x28] sm:$0xff]
        %v212 = vld [vmem:[%s178 + $0x30] sm:$0xff]
        %v213 = vld [vmem:[%s178 + $0x38] sm:$0xff]
        %214 = vadd.xlane.f32.xlu0 %v206
        %v215 = vpop.xlane.xlu0 %214
        %216 = vadd.xlane.f32.xlu0 %v207
        %v217 = vpop.xlane.xlu0 %216
        %218 = vadd.xlane.f32.xlu0 %v208
        %v219 = vpop.xlane.xlu0 %218
        %220 = vadd.xlane.f32.xlu0 %v209
        %v221 = vpop.xlane.xlu0 %220
        %222 = vadd.xlane.f32.xlu0 %v210
        %v223 = vpop.xlane.xlu0 %222
        %224 = vadd.xlane.f32.xlu0 %v211
        %v225 = vpop.xlane.xlu0 %224
        %226 = vadd.xlane.f32.xlu0 %v212
        %v227 = vpop.xlane.xlu0 %226
        %228 = vadd.xlane.f32.xlu0 %v213
        %v229 = vpop.xlane.xlu0 %228
        %230 = vmax.xlane.f32.xlu0 %v206
        %v231 = vpop.xlane.xlu0 %230
        %232 = vmax.xlane.f32.xlu0 %v207
        %v233 = vpop.xlane.xlu0 %232
        %234 = vmax.xlane.f32.xlu0 %v208
        %v235 = vpop.xlane.xlu0 %234
        %236 = vmax.xlane.f32.xlu0 %v209
        %v237 = vpop.xlane.xlu0 %236
        %238 = vmax.xlane.f32.xlu0 %v210
        %v239 = vpop.xlane.xlu0 %238
        %240 = vmax.xlane.f32.xlu0 %v211
        %v241 = vpop.xlane.xlu0 %240
        %242 = vmax.xlane.f32.xlu0 %v212
        %v243 = vpop.xlane.xlu0 %242
        %244 = vmax.xlane.f32.xlu0 %v213
        %v245 = vpop.xlane.xlu0 %244
        %p246 = scmp.eq.s32.totalorder %s22, 0
        // Predicated region
        $region37: #{tpu_custom_call.1} parent=31 // pred_check
          %p247 = pneg %p246
        $region38: #{tpu_custom_call.1} parent=31 // pred_check_branch
          %249 = sbr.rel (%p247) target = $region40
        $region39: #{tpu_custom_call.1} parent=31 // pred_region
          %vm250 = vcmask 7168
          %251 = vst.msk [vmem:[#allocation2] sm:$0xff] %vm250, 0.0
          %252 = vst.msk [vmem:[#allocation2 + $0x8] sm:$0xff] %vm250, 0.0
          %253 = vst.msk [vmem:[#allocation2 + $0x10] sm:$0xff] %vm250, 0.0
          %254 = vst.msk [vmem:[#allocation2 + $0x18] sm:$0xff] %vm250, 0.0
          %255 = vst.msk [vmem:[#allocation2 + $0x20] sm:$0xff] %vm250, 0.0
          %256 = vst.msk [vmem:[#allocation2 + $0x28] sm:$0xff] %vm250, 0.0
          %257 = vst.msk [vmem:[#allocation2 + $0x30] sm:$0xff] %vm250, 0.0
          %258 = vst.msk [vmem:[#allocation2 + $0x38] sm:$0xff] %vm250, 0.0
          %259 = vst.msk [vmem:[#allocation3] sm:$0xff] %vm250, -inf
          %260 = vst.msk [vmem:[#allocation3 + $0x8] sm:$0xff] %vm250, -inf
          %261 = vst.msk [vmem:[#allocation3 + $0x10] sm:$0xff] %vm250, -inf
          %262 = vst.msk [vmem:[#allocation3 + $0x18] sm:$0xff] %vm250, -inf
          %263 = vst.msk [vmem:[#allocation3 + $0x20] sm:$0xff] %vm250, -inf
          %264 = vst.msk [vmem:[#allocation3 + $0x28] sm:$0xff] %vm250, -inf
          %265 = vst.msk [vmem:[#allocation3 + $0x30] sm:$0xff] %vm250, -inf
          %266 = vst.msk [vmem:[#allocation3 + $0x38] sm:$0xff] %vm250, -inf
        $region40: #{tpu_custom_call.1} parent=31 // pred_fallthru
          _
        %v267 = vld [vmem:[#allocation2] sm:$0xff]
        %v268 = vld [vmem:[#allocation2 + $0x8] sm:$0xff]
        %v269 = vld [vmem:[#allocation2 + $0x10] sm:$0xff]
        %v270 = vld [vmem:[#allocation2 + $0x18] sm:$0xff]
        %v271 = vld [vmem:[#allocation2 + $0x20] sm:$0xff]
        %v272 = vld [vmem:[#allocation2 + $0x28] sm:$0xff]
        %v273 = vld [vmem:[#allocation2 + $0x30] sm:$0xff]
        %v274 = vld [vmem:[#allocation2 + $0x38] sm:$0xff]
        %v275 = vadd.f32 %v267, %v215
        %v276 = vadd.f32 %v268, %v217
        %v277 = vadd.f32 %v269, %v219
        %v278 = vadd.f32 %v270, %v221
        %v279 = vadd.f32 %v271, %v223
        %v280 = vadd.f32 %v272, %v225
        %v281 = vadd.f32 %v273, %v227
        %v282 = vadd.f32 %v274, %v229
        %vm283 = vcmask 7168
        %284 = vst.msk [vmem:[#allocation2] sm:$0xff] %vm283, %v275
        %285 = vst.msk [vmem:[#allocation2 + $0x8] sm:$0xff] %vm283, %v276
        %286 = vst.msk [vmem:[#allocation2 + $0x10] sm:$0xff] %vm283, %v277
        %287 = vst.msk [vmem:[#allocation2 + $0x18] sm:$0xff] %vm283, %v278
        %288 = vst.msk [vmem:[#allocation2 + $0x20] sm:$0xff] %vm283, %v279
        %289 = vst.msk [vmem:[#allocation2 + $0x28] sm:$0xff] %vm283, %v280
        %290 = vst.msk [vmem:[#allocation2 + $0x30] sm:$0xff] %vm283, %v281
        %291 = vst.msk [vmem:[#allocation2 + $0x38] sm:$0xff] %vm283, %v282
        %v292 = vld [vmem:[#allocation3] sm:$0xff]
        %v293 = vld [vmem:[#allocation3 + $0x8] sm:$0xff]
        %v294 = vld [vmem:[#allocation3 + $0x10] sm:$0xff]
        %v295 = vld [vmem:[#allocation3 + $0x18] sm:$0xff]
        %v296 = vld [vmem:[#allocation3 + $0x20] sm:$0xff]
        %v297 = vld [vmem:[#allocation3 + $0x28] sm:$0xff]
        %v298 = vld [vmem:[#allocation3 + $0x30] sm:$0xff]
        %v299 = vld [vmem:[#allocation3 + $0x38] sm:$0xff]
        %v300 = vmax.f32 %v292, %v231
        %v301 = vmax.f32 %v293, %v233
        %v302 = vmax.f32 %v294, %v235
        %v303 = vmax.f32 %v295, %v237
        %v304 = vmax.f32 %v296, %v239
        %v305 = vmax.f32 %v297, %v241
        %v306 = vmax.f32 %v298, %v243
        %v307 = vmax.f32 %v299, %v245
        %308 = vst.msk [vmem:[#allocation3] sm:$0xff] %vm283, %v300
        %309 = vst.msk [vmem:[#allocation3 + $0x8] sm:$0xff] %vm283, %v301
        %310 = vst.msk [vmem:[#allocation3 + $0x10] sm:$0xff] %vm283, %v302
        %311 = vst.msk [vmem:[#allocation3 + $0x18] sm:$0xff] %vm283, %v303
        %312 = vst.msk [vmem:[#allocation3 + $0x20] sm:$0xff] %vm283, %v304
        %313 = vst.msk [vmem:[#allocation3 + $0x28] sm:$0xff] %vm283, %v305
        %314 = vst.msk [vmem:[#allocation3 + $0x30] sm:$0xff] %vm283, %v306
        %315 = vst.msk [vmem:[#allocation3 + $0x38] sm:$0xff] %vm283, %v307
        %p316 = scmp.eq.s32.totalorder %s22, 1
        // Predicated region
        $region41: #{tpu_custom_call.1} parent=31 // pred_check
          %p317 = pneg %p316
        $region42: #{tpu_custom_call.1} parent=31 // pred_check_branch
          %319 = sbr.rel (%p317) target = $region44
        $region43: #{tpu_custom_call.1} parent=31 // pred_region
          %v320 = vld [vmem:[%s1] sm:$0xf]
          %v321 = vld [vmem:[%s2] sm:$0xff]
          %v322 = vld [vmem:[%s2 + $0x8] sm:$0xff]
          %v323 = vld [vmem:[%s2 + $0x10] sm:$0xff]
          %v324 = vld [vmem:[%s2 + $0x18] sm:$0xff]
          %v325 = vld [vmem:[%s2 + $0x20] sm:$0xff]
          %v326 = vld [vmem:[%s2 + $0x28] sm:$0xff]
          %v327 = vld [vmem:[%s2 + $0x30] sm:$0xff]
          %v328 = vld [vmem:[%s2 + $0x38] sm:$0xff]
          %v329 = vld [vmem:[#allocation2] sm:$0xff]
          %v330 = vld [vmem:[#allocation2 + $0x8] sm:$0xff]
          %v331 = vld [vmem:[#allocation2 + $0x10] sm:$0xff]
          %v332 = vld [vmem:[#allocation2 + $0x18] sm:$0xff]
          %v333 = vld [vmem:[#allocation2 + $0x20] sm:$0xff]
          %v334 = vld [vmem:[#allocation2 + $0x28] sm:$0xff]
          %v335 = vld [vmem:[#allocation2 + $0x30] sm:$0xff]
          %v336 = vld [vmem:[#allocation2 + $0x38] sm:$0xff]
          %v337 = vmul.f32 %v329, 0.00390625
          %v338 = vmul.f32 %v330, 0.00390625
          %v339 = vmul.f32 %v331, 0.00390625
          %v340 = vmul.f32 %v332, 0.00390625
          %v341 = vmul.f32 %v333, 0.00390625
          %v342 = vmul.f32 %v334, 0.00390625
          %v343 = vmul.f32 %v335, 0.00390625
          %v344 = vmul.f32 %v336, 0.00390625
          %vm345 = vcmask 523264
          %v347 = vsel %vm345, %v320, 0
          %349 = vmatprep.subr.mxu0 0.0
          %350 = vmatpush1.msra.mxu0 %v337
          %351 = vmatprep.subr.mxu0 0.0
          %352 = vmatpush1.msra.mxu0 %v338
          %353 = vmatprep.subr.mxu0 0.0
          %354 = vmatpush1.msra.mxu0 %v339
          %355 = vmatprep.subr.mxu0 0.0
          %356 = vmatpush1.msra.mxu0 %v340
          %357 = vmatprep.subr.mxu0 0.0
          %358 = vmatpush1.msra.mxu0 %v341
          %359 = vmatprep.subr.mxu0 0.0
          %360 = vmatpush1.msra.mxu0 %v342
          %361 = vmatprep.subr.mxu0 0.0
          %362 = vmatpush1.msra.mxu0 %v343
          %363 = vmatprep.subr.mxu0 0.0
          %364 = vmatpush1.msra.mxu0 %v344
          %365 = vmatprep.subr.mxu0 0.0
          %366 = vmatpush1.msra.mxu0 0.0
          %367 = vmatprep.subr.mxu0 0.0
          %368 = vmatpush1.msra.mxu0 0.0
          %369 = vmatprep.subr.mxu0 0.0
          %370 = vmatpush1.msra.mxu0 0.0
          %371 = vmatprep.subr.mxu0 0.0
          %372 = vmatpush1.msra.mxu0 0.0
          %373 = vmatprep.subr.mxu0 0.0
          %374 = vmatpush1.msra.mxu0 0.0
          %375 = vmatprep.subr.mxu0 0.0
          %376 = vmatpush1.msra.mxu0 0.0
          %377 = vmatprep.subr.mxu0 0.0
          %378 = vmatpush1.msra.mxu0 0.0
          %379 = vmatprep.subr.mxu0 0.0
          %380 = vmatpush1.msra.mxu0 0.0
          %381 = vmatprep.subr.mxu0 0.0
          %382 = vmatpush1.msra.mxu0 0.0
          %383 = vmatprep.subr.mxu0 0.0
          %384 = vmatpush1.msra.mxu0 0.0
          %385 = vmatprep.subr.mxu0 0.0
          %386 = vmatpush1.msra.mxu0 0.0
          %387 = vmatprep.subr.mxu0 0.0
          %388 = vmatpush1.msra.mxu0 0.0
          %389 = vmatprep.subr.mxu0 0.0
          %390 = vmatpush1.msra.mxu0 0.0
          %391 = vmatprep.subr.mxu0 0.0
          %392 = vmatpush1.msra.mxu0 0.0
          %393 = vmatprep.subr.mxu0 0.0
          %394 = vmatpush1.msra.mxu0 0.0
          %395 = vmatprep.subr.mxu0 0.0
          %396 = vmatpush1.msra.mxu0 0.0
          %397 = vmatprep.subr.mxu0 0.0
          %398 = vmatpush1.msra.mxu0 0.0
          %399 = vmatprep.subr.mxu0 0.0
          %400 = vmatpush1.msra.mxu0 0.0
          %401 = vmatprep.subr.mxu0 0.0
          %402 = vmatpush1.msra.mxu0 0.0
          %403 = vmatprep.subr.mxu0 0.0
          %404 = vmatpush1.msra.mxu0 0.0
          %405 = vmatprep.subr.mxu0 0.0
          %406 = vmatpush1.msra.mxu0 0.0
          %407 = vmatprep.subr.mxu0 0.0
          %408 = vmatpush1.msra.mxu0 0.0
          %409 = vmatprep.subr.mxu0 0.0
          %410 = vmatpush1.msra.mxu0 0.0
          %411 = vmatprep.subr.mxu0 0.0
          %412 = vmatpush1.msra.mxu0 0.0
          %413 = vmatprep.mubr.f32.mxu0 0.0
          %414 = vmatmul.mubr.f32.gmra.mrb[0].mxu0 %v347
          %v415 = vpop.f32.mrb[0].mxu0
          %v416 = vadd.f32 0.0, %v415
          %v417 = vpop.f32.mrb[0].mxu0
          %418 = vdwg.mxu0
          %v419 = vmax.f32 %v416, 0.0
          %v420 = vld [vmem:[#allocation3] sm:$0xff]
          %v421 = vld [vmem:[#allocation3 + $0x8] sm:$0xff]
          %v422 = vld [vmem:[#allocation3 + $0x10] sm:$0xff]
          %v423 = vld [vmem:[#allocation3 + $0x18] sm:$0xff]
          %v424 = vld [vmem:[#allocation3 + $0x20] sm:$0xff]
          %v425 = vld [vmem:[#allocation3 + $0x28] sm:$0xff]
          %v426 = vld [vmem:[#allocation3 + $0x30] sm:$0xff]
          %v427 = vld [vmem:[#allocation3 + $0x38] sm:$0xff]
          %428 = vmatprep.subr.mxu0 0.0
          %429 = vmatpush1.msra.mxu0 %v420
          %430 = vmatprep.subr.mxu0 0.0
          %431 = vmatpush1.msra.mxu0 %v421
          %432 = vmatprep.subr.mxu0 0.0
          %433 = vmatpush1.msra.mxu0 %v422
          %434 = vmatprep.subr.mxu0 0.0
          %435 = vmatpush1.msra.mxu0 %v423
          %436 = vmatprep.subr.mxu0 0.0
          %437 = vmatpush1.msra.mxu0 %v424
          %438 = vmatprep.subr.mxu0 0.0
          %439 = vmatpush1.msra.mxu0 %v425
          %440 = vmatprep.subr.mxu0 0.0
          %441 = vmatpush1.msra.mxu0 %v426
          %442 = vmatprep.subr.mxu0 0.0
          %443 = vmatpush1.msra.mxu0 %v427
          %444 = vmatprep.subr.mxu0 0.0
          %445 = vmatpush1.msra.mxu0 0.0
          %446 = vmatprep.subr.mxu0 0.0
          %447 = vmatpush1.msra.mxu0 0.0
          %448 = vmatprep.subr.mxu0 0.0
          %449 = vmatpush1.msra.mxu0 0.0
          %450 = vmatprep.subr.mxu0 0.0
          %451 = vmatpush1.msra.mxu0 0.0
          %452 = vmatprep.subr.mxu0 0.0
          %453 = vmatpush1.msra.mxu0 0.0
          %454 = vmatprep.subr.mxu0 0.0
          %455 = vmatpush1.msra.mxu0 0.0
          %456 = vmatprep.subr.mxu0 0.0
          %457 = vmatpush1.msra.mxu0 0.0
          %458 = vmatprep.subr.mxu0 0.0
          %459 = vmatpush1.msra.mxu0 0.0
          %460 = vmatprep.subr.mxu0 0.0
          %461 = vmatpush1.msra.mxu0 0.0
          %462 = vmatprep.subr.mxu0 0.0
          %463 = vmatpush1.msra.mxu0 0.0
          %464 = vmatprep.subr.mxu0 0.0
          %465 = vmatpush1.msra.mxu0 0.0
          %466 = vmatprep.subr.mxu0 0.0
          %467 = vmatpush1.msra.mxu0 0.0
          %468 = vmatprep.subr.mxu0 0.0
          %469 = vmatpush1.msra.mxu0 0.0
          %470 = vmatprep.subr.mxu0 0.0
          %471 = vmatpush1.msra.mxu0 0.0
          %472 = vmatprep.subr.mxu0 0.0
          %473 = vmatpush1.msra.mxu0 0.0
          %474 = vmatprep.subr.mxu0 0.0
          %475 = vmatpush1.msra.mxu0 0.0
          %476 = vmatprep.subr.mxu0 0.0
          %477 = vmatpush1.msra.mxu0 0.0
          %478 = vmatprep.subr.mxu0 0.0
          %479 = vmatpush1.msra.mxu0 0.0
          %480 = vmatprep.subr.mxu0 0.0
          %481 = vmatpush1.msra.mxu0 0.0
          %482 = vmatprep.subr.mxu0 0.0
          %483 = vmatpush1.msra.mxu0 0.0
          %484 = vmatprep.subr.mxu0 0.0
          %485 = vmatpush1.msra.mxu0 0.0
          %486 = vmatprep.subr.mxu0 0.0
          %487 = vmatpush1.msra.mxu0 0.0
          %488 = vmatprep.subr.mxu0 0.0
          %489 = vmatpush1.msra.mxu0 0.0
          %490 = vmatprep.subr.mxu0 0.0
          %491 = vmatpush1.msra.mxu0 0.0
          %492 = vmatprep.mubr.f32.mxu0 0.0
          %493 = vmatmul.mubr.f32.gmra.mrb[0].mxu0 %v347
          %v494 = vpop.f32.mrb[0].mxu0
          %v495 = vadd.f32 0.0, %v494
          %v496 = vpop.f32.mrb[0].mxu0
          %497 = vdwg.mxu0
          %v498 = vmax.f32 %v495, 0.0
          %vm499 = vcmask 31744
          %v501 = vsel %vm499, %v321, 0
          %v504 = vsel %vm499, %v322, 0
          %v507 = vsel %vm499, %v323, 0
          %v510 = vsel %vm499, %v324, 0
          %v513 = vsel %vm499, %v325, 0
          %v516 = vsel %vm499, %v326, 0
          %v519 = vsel %vm499, %v327, 0
          %v522 = vsel %vm499, %v328, 0
          %vm524 = vcmask 1043456
          %v526 = vsel %vm524, %v498, 0
          %528 = vmatprep.subr.mxu0 0.0
          %529 = vmatpush1.msra.mxu0 %v526
          %530 = vmatprep.subr.mxu0 0.0
          %531 = vmatpush1.msra.mxu0 0.0
          %532 = vmatprep.subr.mxu0 0.0
          %533 = vmatpush1.msra.mxu0 0.0
          %534 = vmatprep.subr.mxu0 0.0
          %535 = vmatpush1.msra.mxu0 0.0
          %536 = vmatprep.subr.mxu0 0.0
          %537 = vmatpush1.msra.mxu0 0.0
          %538 = vmatprep.subr.mxu0 0.0
          %539 = vmatpush1.msra.mxu0 0.0
          %540 = vmatprep.subr.mxu0 0.0
          %541 = vmatpush1.msra.mxu0 0.0
          %542 = vmatprep.subr.mxu0 0.0
          %543 = vmatpush1.msra.mxu0 0.0
          %544 = vmatprep.subr.mxu0 0.0
          %545 = vmatpush1.msra.mxu0 0.0
          %546 = vmatprep.subr.mxu0 0.0
          %547 = vmatpush1.msra.mxu0 0.0
          %548 = vmatprep.subr.mxu0 0.0
          %549 = vmatpush1.msra.mxu0 0.0
          %550 = vmatprep.subr.mxu0 0.0
          %551 = vmatpush1.msra.mxu0 0.0
          %552 = vmatprep.subr.mxu0 0.0
          %553 = vmatpush1.msra.mxu0 0.0
          %554 = vmatprep.subr.mxu0 0.0
          %555 = vmatpush1.msra.mxu0 0.0
          %556 = vmatprep.subr.mxu0 0.0
          %557 = vmatpush1.msra.mxu0 0.0
          %558 = vmatprep.subr.mxu0 0.0
          %559 = vmatpush1.msra.mxu0 0.0
          %560 = vmatprep.subr.mxu0 0.0
          %561 = vmatpush1.msra.mxu0 0.0
          %562 = vmatprep.subr.mxu0 0.0
          %563 = vmatpush1.msra.mxu0 0.0
          %564 = vmatprep.subr.mxu0 0.0
          %565 = vmatpush1.msra.mxu0 0.0
          %566 = vmatprep.subr.mxu0 0.0
          %567 = vmatpush1.msra.mxu0 0.0
          %568 = vmatprep.subr.mxu0 0.0
          %569 = vmatpush1.msra.mxu0 0.0
          %570 = vmatprep.subr.mxu0 0.0
          %571 = vmatpush1.msra.mxu0 0.0
          %572 = vmatprep.subr.mxu0 0.0
          %573 = vmatpush1.msra.mxu0 0.0
          %574 = vmatprep.subr.mxu0 0.0
          %575 = vmatpush1.msra.mxu0 0.0
          %576 = vmatprep.subr.mxu0 0.0
          %577 = vmatpush1.msra.mxu0 0.0
          %578 = vmatprep.subr.mxu0 0.0
          %579 = vmatpush1.msra.mxu0 0.0
          %580 = vmatprep.subr.mxu0 0.0
          %581 = vmatpush1.msra.mxu0 0.0
          %582 = vmatprep.subr.mxu0 0.0
          %583 = vmatpush1.msra.mxu0 0.0
          %584 = vmatprep.subr.mxu0 0.0
          %585 = vmatpush1.msra.mxu0 0.0
          %586 = vmatprep.subr.mxu0 0.0
          %587 = vmatpush1.msra.mxu0 0.0
          %588 = vmatprep.subr.mxu0 0.0
          %589 = vmatpush1.msra.mxu0 0.0
          %590 = vmatprep.subr.mxu0 0.0
          %591 = vmatpush1.msra.mxu0 0.0
          %592 = vmatprep.mubr.f32.mxu0 0.0
          %593 = vmatmul.mubr.f32.gmra.mrb[0].mxu0 %v501
          %v594 = vpop.f32.mrb[0].mxu0
          %v595 = vadd.f32 0.0, %v594
          %v596 = vpop.f32.mrb[0].mxu0
          %597 = vmatprep.mubr.f32.mxu0 0.0
          %598 = vmatmul.mubr.f32.gmra.mrb[0].mxu0 %v504
          %v599 = vpop.f32.mrb[0].mxu0
          %v600 = vadd.f32 0.0, %v599
          %v601 = vpop.f32.mrb[0].mxu0
          %602 = vmatprep.mubr.f32.mxu0 0.0
          %603 = vmatmul.mubr.f32.gmra.mrb[0].mxu0 %v507
          %v604 = vpop.f32.mrb[0].mxu0
          %v605 = vadd.f32 0.0, %v604
          %v606 = vpop.f32.mrb[0].mxu0
          %607 = vmatprep.mubr.f32.mxu0 0.0
          %608 = vmatmul.mubr.f32.gmra.mrb[0].mxu0 %v510
          %v609 = vpop.f32.mrb[0].mxu0
          %v610 = vadd.f32 0.0, %v609
          %v611 = vpop.f32.mrb[0].mxu0
          %612 = vmatprep.mubr.f32.mxu0 0.0
          %613 = vmatmul.mubr.f32.gmra.mrb[0].mxu0 %v513
          %v614 = vpop.f32.mrb[0].mxu0
          %v615 = vadd.f32 0.0, %v614
          %v616 = vpop.f32.mrb[0].mxu0
          %617 = vmatprep.mubr.f32.mxu0 0.0
          %618 = vmatmul.mubr.f32.gmra.mrb[0].mxu0 %v516
          %v619 = vpop.f32.mrb[0].mxu0
          %v620 = vadd.f32 0.0, %v619
          %v621 = vpop.f32.mrb[0].mxu0
          %622 = vmatprep.mubr.f32.mxu0 0.0
          %623 = vmatmul.mubr.f32.gmra.mrb[0].mxu0 %v519
          %v624 = vpop.f32.mrb[0].mxu0
          %v625 = vadd.f32 0.0, %v624
          %v626 = vpop.f32.mrb[0].mxu0
          %627 = vmatprep.mubr.f32.mxu0 0.0
          %628 = vmatmul.mubr.f32.gmra.mrb[0].mxu0 %v522
          %v629 = vpop.f32.mrb[0].mxu0
          %v630 = vadd.f32 0.0, %v629
          %v631 = vpop.f32.mrb[0].mxu0
          %632 = vdwg.mxu0
          %v634 = vsel %vm524, %v419, 0
          %636 = vmatprep.subr.mxu0 0.0
          %637 = vmatpush1.msra.mxu0 %v634
          %638 = vmatprep.subr.mxu0 0.0
          %639 = vmatpush1.msra.mxu0 0.0
          %640 = vmatprep.subr.mxu0 0.0
          %641 = vmatpush1.msra.mxu0 0.0
          %642 = vmatprep.subr.mxu0 0.0
          %643 = vmatpush1.msra.mxu0 0.0
          %644 = vmatprep.subr.mxu0 0.0
          %645 = vmatpush1.msra.mxu0 0.0
          %646 = vmatprep.subr.mxu0 0.0
          %647 = vmatpush1.msra.mxu0 0.0
          %648 = vmatprep.subr.mxu0 0.0
          %649 = vmatpush1.msra.mxu0 0.0
          %650 = vmatprep.subr.mxu0 0.0
          %651 = vmatpush1.msra.mxu0 0.0
          %652 = vmatprep.subr.mxu0 0.0
          %653 = vmatpush1.msra.mxu0 0.0
          %654 = vmatprep.subr.mxu0 0.0
          %655 = vmatpush1.msra.mxu0 0.0
          %656 = vmatprep.subr.mxu0 0.0
          %657 = vmatpush1.msra.mxu0 0.0
          %658 = vmatprep.subr.mxu0 0.0
          %659 = vmatpush1.msra.mxu0 0.0
          %660 = vmatprep.subr.mxu0 0.0
          %661 = vmatpush1.msra.mxu0 0.0
          %662 = vmatprep.subr.mxu0 0.0
          %663 = vmatpush1.msra.mxu0 0.0
          %664 = vmatprep.subr.mxu0 0.0
          %665 = vmatpush1.msra.mxu0 0.0
          %666 = vmatprep.subr.mxu0 0.0
          %667 = vmatpush1.msra.mxu0 0.0
          %668 = vmatprep.subr.mxu0 0.0
          %669 = vmatpush1.msra.mxu0 0.0
          %670 = vmatprep.subr.mxu0 0.0
          %671 = vmatpush1.msra.mxu0 0.0
          %672 = vmatprep.subr.mxu0 0.0
          %673 = vmatpush1.msra.mxu0 0.0
          %674 = vmatprep.subr.mxu0 0.0
          %675 = vmatpush1.msra.mxu0 0.0
          %676 = vmatprep.subr.mxu0 0.0
          %677 = vmatpush1.msra.mxu0 0.0
          %678 = vmatprep.subr.mxu0 0.0
          %679 = vmatpush1.msra.mxu0 0.0
          %680 = vmatprep.subr.mxu0 0.0
          %681 = vmatpush1.msra.mxu0 0.0
          %682 = vmatprep.subr.mxu0 0.0
          %683 = vmatpush1.msra.mxu0 0.0
          %684 = vmatprep.subr.mxu0 0.0
          %685 = vmatpush1.msra.mxu0 0.0
          %686 = vmatprep.subr.mxu0 0.0
          %687 = vmatpush1.msra.mxu0 0.0
          %688 = vmatprep.subr.mxu0 0.0
          %689 = vmatpush1.msra.mxu0 0.0
          %690 = vmatprep.subr.mxu0 0.0
          %691 = vmatpush1.msra.mxu0 0.0
          %692 = vmatprep.subr.mxu0 0.0
          %693 = vmatpush1.msra.mxu0 0.0
          %694 = vmatprep.subr.mxu0 0.0
          %695 = vmatpush1.msra.mxu0 0.0
          %696 = vmatprep.subr.mxu0 0.0
          %697 = vmatpush1.msra.mxu0 0.0
          %698 = vmatprep.subr.mxu0 0.0
          %699 = vmatpush1.msra.mxu0 0.0
          %700 = vmatprep.mubr.f32.mxu0 0.0
          %701 = vmatmul.mubr.f32.gmra.mrb[0].mxu0 %v501
          %v702 = vpop.f32.mrb[0].mxu0
          %v703 = vadd.f32 %v595, %v702
          %v704 = vpop.f32.mrb[0].mxu0
          %705 = vmatprep.mubr.f32.mxu0 0.0
          %706 = vmatmul.mubr.f32.gmra.mrb[0].mxu0 %v504
          %v707 = vpop.f32.mrb[0].mxu0
          %v708 = vadd.f32 %v600, %v707
          %v709 = vpop.f32.mrb[0].mxu0
          %710 = vmatprep.mubr.f32.mxu0 0.0
          %711 = vmatmul.mubr.f32.gmra.mrb[0].mxu0 %v507
          %v712 = vpop.f32.mrb[0].mxu0
          %v713 = vadd.f32 %v605, %v712
          %v714 = vpop.f32.mrb[0].mxu0
          %715 = vmatprep.mubr.f32.mxu0 0.0
          %716 = vmatmul.mubr.f32.gmra.mrb[0].mxu0 %v510
          %v717 = vpop.f32.mrb[0].mxu0
          %v718 = vadd.f32 %v610, %v717
          %v719 = vpop.f32.mrb[0].mxu0
          %720 = vmatprep.mubr.f32.mxu0 0.0
          %721 = vmatmul.mubr.f32.gmra.mrb[0].mxu0 %v513
          %v722 = vpop.f32.mrb[0].mxu0
          %v723 = vadd.f32 %v615, %v722
          %v724 = vpop.f32.mrb[0].mxu0
          %725 = vmatprep.mubr.f32.mxu0 0.0
          %726 = vmatmul.mubr.f32.gmra.mrb[0].mxu0 %v516
          %v727 = vpop.f32.mrb[0].mxu0
          %v728 = vadd.f32 %v620, %v727
          %v729 = vpop.f32.mrb[0].mxu0
          %730 = vmatprep.mubr.f32.mxu0 0.0
          %731 = vmatmul.mubr.f32.gmra.mrb[0].mxu0 %v519
          %v732 = vpop.f32.mrb[0].mxu0
          %v733 = vadd.f32 %v625, %v732
          %v734 = vpop.f32.mrb[0].mxu0
          %735 = vmatprep.mubr.f32.mxu0 0.0
          %736 = vmatmul.mubr.f32.gmra.mrb[0].mxu0 %v522
          %v737 = vpop.f32.mrb[0].mxu0
          %v738 = vadd.f32 %v630, %v737
          %v739 = vpop.f32.mrb[0].mxu0
          %740 = vdwg.mxu0
          %v741 = vxor.u32 %v703, 2147483648
          %v742 = vxor.u32 %v708, 2147483648
          %v743 = vxor.u32 %v713, 2147483648
          %v744 = vxor.u32 %v718, 2147483648
          %v745 = vxor.u32 %v723, 2147483648
          %v746 = vxor.u32 %v728, 2147483648
          %v747 = vxor.u32 %v733, 2147483648
          %v748 = vxor.u32 %v738, 2147483648
          %v749 = vmul.f32 %v741, 1.442695
          %v750 = vpow.pop %v749
          %v751 = vmul.f32 %v742, 1.442695
          %v752 = vpow.pop %v751
          %v753 = vmul.f32 %v743, 1.442695
          %v754 = vpow.pop %v753
          %v755 = vmul.f32 %v744, 1.442695
          %v756 = vpow.pop %v755
          %v757 = vmul.f32 %v745, 1.442695
          %v758 = vpow.pop %v757
          %v759 = vmul.f32 %v746, 1.442695
          %v760 = vpow.pop %v759
          %v761 = vmul.f32 %v747, 1.442695
          %v762 = vpow.pop %v761
          %v763 = vmul.f32 %v748, 1.442695
          %v764 = vpow.pop %v763
          %v765 = vadd.f32 %v750, 1.0
          %v766 = vadd.f32 %v752, 1.0
          %v767 = vadd.f32 %v754, 1.0
          %v768 = vadd.f32 %v756, 1.0
          %v769 = vadd.f32 %v758, 1.0
          %v770 = vadd.f32 %v760, 1.0
          %v771 = vadd.f32 %v762, 1.0
          %v772 = vadd.f32 %v764, 1.0
          %v773 = vrcp.pop %v765
          %v774 = vmul.f32 1.0, %v773
          %v775 = vrcp.pop %v766
          %v776 = vmul.f32 1.0, %v775
          %v777 = vrcp.pop %v767
          %v778 = vmul.f32 1.0, %v777
          %v779 = vrcp.pop %v768
          %v780 = vmul.f32 1.0, %v779
          %v781 = vrcp.pop %v769
          %v782 = vmul.f32 1.0, %v781
          %v783 = vrcp.pop %v770
          %v784 = vmul.f32 1.0, %v783
          %v785 = vrcp.pop %v771
          %v786 = vmul.f32 1.0, %v785
          %v787 = vrcp.pop %v772
          %v788 = vmul.f32 1.0, %v787
          %789 = vst.msk [vmem:[%s205] sm:$0xff] %vm283, %v774
          %790 = vst.msk [vmem:[%s205 + $0x8] sm:$0xff] %vm283, %v776
          %791 = vst.msk [vmem:[%s205 + $0x10] sm:$0xff] %vm283, %v778
          %792 = vst.msk [vmem:[%s205 + $0x18] sm:$0xff] %vm283, %v780
          %793 = vst.msk [vmem:[%s205 + $0x20] sm:$0xff] %vm283, %v782
          %794 = vst.msk [vmem:[%s205 + $0x28] sm:$0xff] %vm283, %v784
          %795 = vst.msk [vmem:[%s205 + $0x30] sm:$0xff] %vm283, %v786
          %796 = vst.msk [vmem:[%s205 + $0x38] sm:$0xff] %vm283, %v788
        $region44: #{tpu_custom_call.1} parent=31 // pred_fallthru
          _
        %p797 = scmp.lt.s32.totalorder %s21, 1
        %s798 = scalar_select %p797, %s21, 1
        %s799 = smul.addr %s798, 8
        %s800 = smul.addr %s799, 8
        %s801 = scalar_lea.vmem %s3, %s800
        // Predicated region
        $region45: #{tpu_custom_call.1} parent=31 // pred_check
          %p802 = pneg %p117
        $region46: #{tpu_custom_call.1} parent=31 // pred_check_branch
          %804 = sbr.rel (%p802) target = $region48
        $region47: #{tpu_custom_call.1} parent=31 // pred_region
          _
        $region48: #{tpu_custom_call.1} parent=31 // pred_fallthru
          _
      $region32: #{tpu_custom_call.1} parent=5 // pred_fallthru
        _
      %p805 = scmp.le.s32.totalorder 2, %s12
      // Predicated region
      $region49: #{tpu_custom_call.1} parent=5 // pred_check
        %p806 = pneg %p805
      $region50: #{tpu_custom_call.1} parent=5 // pred_check_branch
        %808 = sbr.rel (%p806) target = $region52
      $region51: #{tpu_custom_call.1} parent=5 // pred_region
        %s809 = ssub.s32 %s12, 2
        // Predicated region
        $region53: #{tpu_custom_call.1} parent=51 // pred_check
          %p810 = pneg %p123
        $region54: #{tpu_custom_call.1} parent=51 // pred_check_branch
          %812 = sbr.rel (%p810) target = $region56
        $region55: #{tpu_custom_call.1} parent=51 // pred_region
          %p813 = scmp.lt.s32.totalorder %s23, 1
          %s814 = scalar_select %p813, %s23, 1
          %s815 = smul.addr %s814, 8
          %s816 = smul.addr %s815, 8
          %s817 = scalar_lea.vmem %s3, %s816
        $region56: #{tpu_custom_call.1} parent=51 // pred_fallthru
          _
      $region52: #{tpu_custom_call.1} parent=5 // pred_fallthru
        _
    $region6: #{tpu_custom_call.1} parent=1 // loop_footer
      %s16 = sadd.s32 1, %s12
    $region7: #{tpu_custom_call.1} parent=1 // loop_footer_branch
      %11 = sbr.rel target = $region3
    $region8: #{tpu_custom_call.1} parent=1 // loop_exit
      _
    %818 = vsyncpa [#allocation5], 1
    %s819 = scalar_lea.sflag [#allocation5], 1
    %820 = vsyncpa %s819, 1

</llo_original>
